<compile_context>
chip_gen: v5e
topology: v5e:2x2
jax: 0.10.0
libtpu: 0.0.40
codegen_flags: <defaults>
</compile_context>

<pallas_src>
import jax
import jax.numpy as jnp
from jax import lax
from jax.experimental import pallas as pl
from jax.experimental.pallas import tpu as pltpu


def _round_up(n: int, m: int) -> int:
    return ((n + m - 1) // m) * m


def _cdiv(n: int, m: int) -> int:
    return (n + m - 1) // m


def mlp_kernel(x_ref,
               w1_ref, b1_ref,
               w2_ref, b2_ref,
               w3_ref, b3_ref,
               w4_ref, b4_ref,
               o_ref):
    # x_ref: (tile, 9) block of the row-major input (batch on sublanes).
    x = x_ref[...]

    # Layer 1: contract the 9-feature axis of both operands: (64,9) x (tile,9)^T.
    # The (64, tile) result puts the batch on the 128-lane axis for the rest of
    # the network, so no standalone transpose pass over the input is needed.
    h1 = lax.dot_general(w1_ref[...], x, (((1,), (1,)), ((), ())),
                         preferred_element_type=jnp.float32)
    h1 = jnp.maximum(h1 + b1_ref[...], 0.0)                      # (64, tile)

    # Layers 2-3 on the MXU in feature-major form: (out,in) @ (in,tile).
    # Activations are cast to the (possibly bf16) weight dtype for the MXU push.
    h2 = jnp.dot(w2_ref[...], h1.astype(w2_ref.dtype),
                 preferred_element_type=jnp.float32)
    h2 = jnp.maximum(h2 + b2_ref[...], 0.0)                      # (32, tile)

    h3 = jnp.dot(w3_ref[...], h2.astype(w3_ref.dtype),
                 preferred_element_type=jnp.float32)
    h3 = jnp.maximum(h3 + b3_ref[...], 0.0)                      # (16, tile)

    # Final 16->1 layer as a tiny MXU matmul -> lane-dense (1, tile) output row.
    out = jnp.dot(w4_ref[...], h3, preferred_element_type=jnp.float32)
    o_ref[...] = (out + b4_ref[0]).astype(o_ref.dtype)


def mlp_forward(x, params, *, tile_b: int = 16384, mxu_dtype=jnp.float32):
    """x: (B, 9) float32. Returns (B, 1) float32, matching the PyTorch module.

    mxu_dtype=jnp.bfloat16 enables bf16 MXU operands for layers 2-3 (v6e/v7x).
    """
    (w1, b1), (w2, b2), (w3, b3), (w4, b4) = params
    B, F = x.shape
    assert F == 9, f"expected 9 input features, got {F}"
    x = jnp.asarray(x, jnp.float32)

    # --- Batch tile selection -------------------------------------------------
    # Big tiles amortize the ~0.35 us per-grid-step overhead (multiple of 128).
    tile = min(max(128, (tile_b // 128) * 128), _round_up(B, 128))
    half = _round_up(_cdiv(B, 2), 128)
    if half >= 1024:
        # Keep >=2 grid steps once each half is big enough, so ("parallel",)
        # can feed both TensorCores on v7x (no effect on v5e/v6e).
        tile = min(tile, half)
    grid = (_cdiv(B, tile),)          # last block may be partial; no jnp.pad copy

    # --- Per-step VMEM footprint estimate (f32, double-buffered blocks) --------
    est = (2 * tile * 128 * 4                    # (tile,9) input block, lanes pad to 128
           + 2 * tile * 8 * 4                    # (1,tile) output block, sublanes pad to 8
           + tile * (16 + 64 + 32 + 16) * 4      # x^T / h1 / h2 / h3 live values
           + (1 << 20))                          # resident weights/biases + slack
    vmem_limit = min(64 * 1024 * 1024, max(32 * 1024 * 1024, int(est * 1.5)))

    # --- Parameter packaging (PyTorch-native (out, in) weights) ----------------
    w1 = jnp.asarray(w1, jnp.float32)
    w2 = jnp.asarray(w2, mxu_dtype)              # bf16 here halves MXU push / VMEM
    w3 = jnp.asarray(w3, mxu_dtype)              # traffic of the widest layers
    w4 = jnp.asarray(w4, jnp.float32)
    b1c = jnp.asarray(b1, jnp.float32).reshape(-1, 1)   # broadcast over lanes
    b2c = jnp.asarray(b2, jnp.float32).reshape(-1, 1)
    b3c = jnp.asarray(b3, jnp.float32).reshape(-1, 1)
    b4s = jnp.asarray(b4, jnp.float32).reshape((1,))    # scalar bias -> SMEM

    const = lambda i: (0, 0)                     # weights stay resident in VMEM
    out = pl.pallas_call(
        mlp_kernel,
        out_shape=jax.ShapeDtypeStruct((1, B), jnp.float32),
        grid=grid,
        in_specs=[
            pl.BlockSpec((tile, 9), lambda i: (i, 0)),        # streamed input tiles
            pl.BlockSpec(w1.shape, const), pl.BlockSpec(b1c.shape, const),
            pl.BlockSpec(w2.shape, const), pl.BlockSpec(b2c.shape, const),
            pl.BlockSpec(w3.shape, const), pl.BlockSpec(b3c.shape, const),
            pl.BlockSpec(w4.shape, const),
            pl.BlockSpec(memory_space=pltpu.MemorySpace.SMEM),  # scalar b4
        ],
        out_specs=pl.BlockSpec((1, tile), lambda i: (0, i)),    # lane-dense row
        compiler_params=pltpu.CompilerParams(
            dimension_semantics=("parallel",),                  # megacore on v7x
            vmem_limit_bytes=vmem_limit),
    )(x, w1, b1c, w2, b2c, w3, b3c, w4, b4s)

    # TODO(synk): if the producer already emits bf16 inputs, stream x (and w1)
    # in bf16 too to additionally halve HBM input traffic on v6e/v7x.
    return out[0, :B].reshape(B, 1)


def init_linear(key, fan_in, fan_out):
    # PyTorch nn.Linear default init: U(-1/sqrt(fan_in), 1/sqrt(fan_in)),
    # weight in (out, in) layout, bias as (out,).
    kw, kb = jax.random.split(key)
    bound = 1.0 / float(fan_in) ** 0.5
    w = jax.random.uniform(kw, (fan_out, fan_in), jnp.float32, -bound, bound)
    b = jax.random.uniform(kb, (fan_out,), jnp.float32, -bound, bound)
    return w, b


def reference_forward(x, params):
    """Pure-JAX reference of the PyTorch module (HIGHEST-precision matmuls)."""
    (w1, b1), (w2, b2), (w3, b3), (w4, b4) = params
    hi = lax.Precision.HIGHEST
    h = jnp.maximum(jnp.dot(x, w1.T, precision=hi) + b1, 0.0)
    h = jnp.maximum(jnp.dot(h, w2.T, precision=hi) + b2, 0.0)
    h = jnp.maximum(jnp.dot(h, w3.T, precision=hi) + b3, 0.0)
    return jnp.dot(h, w4.T, precision=hi) + b4


if __name__ == "__main__":
    key = jax.random.PRNGKey(0)
    kx, k1, k2, k3, k4 = jax.random.split(key, 5)

    B = 8
    x = jax.random.normal(kx, (B, 9), jnp.float32)
    params = (
        init_linear(k1, 9, 64),
        init_linear(k2, 64, 32),
        init_linear(k3, 32, 16),
        init_linear(k4, 16, 1),
    )

    ref = reference_forward(x, params)                       # (B, 1)

    # Default f32 path: matches the PyTorch module numerics.
    out = jax.block_until_ready(mlp_forward(x, params))
    assert out.shape == (B, 1)
    assert jnp.allclose(out, ref, atol=1e-4, rtol=1e-4), "f32 kernel mismatch"

    # bf16 MXU-operand path for layers 2-3 (v6e/v7x recommendation), looser tol.
    out_bf16 = jax.block_until_ready(mlp_forward(x, params, mxu_dtype=jnp.bfloat16))
    assert out_bf16.shape == (B, 1)
    assert jnp.allclose(out_bf16, ref, atol=5e-2, rtol=5e-2), "bf16 kernel mismatch"

    print("KERNEL_OK")
</pallas_src>

<mosaic_0001>
module attributes {stable_mosaic.version = 11 : i64} {
  func.func @mlp_kernel(%arg0: i32, %arg1: memref<128x9xf32, #tpu.memory_space<vmem>>, %arg2: memref<64x9xf32, #tpu.memory_space<vmem>>, %arg3: memref<64x1xf32, #tpu.memory_space<vmem>>, %arg4: memref<32x64xf32, #tpu.memory_space<vmem>>, %arg5: memref<32x1xf32, #tpu.memory_space<vmem>>, %arg6: memref<16x32xf32, #tpu.memory_space<vmem>>, %arg7: memref<16x1xf32, #tpu.memory_space<vmem>>, %arg8: memref<1x16xf32, #tpu.memory_space<vmem>>, %arg9: memref<1xf32, #tpu.memory_space<smem>>, %arg10: memref<1x128xf32, #tpu.memory_space<vmem>>) attributes {dimension_semantics = [#tpu.dimension_semantics<parallel>], iteration_bounds = array<i64: 1>, scalar_prefetch = 0 : i64, scratch_operands = 0 : i64, tpu.core_type = #tpu.core_type<tc>, window_params = [{transform_indices = @transform_0, window_bounds = array<i64: 128, 9>}, {pipeline_mode = #tpu.pipeline_mode<synchronous>, transform_indices = @transform_1, window_bounds = array<i64: 64, 9>}, {pipeline_mode = #tpu.pipeline_mode<synchronous>, transform_indices = @transform_2, window_bounds = array<i64: 64, 1>}, {pipeline_mode = #tpu.pipeline_mode<synchronous>, transform_indices = @transform_3, window_bounds = array<i64: 32, 64>}, {pipeline_mode = #tpu.pipeline_mode<synchronous>, transform_indices = @transform_4, window_bounds = array<i64: 32, 1>}, {pipeline_mode = #tpu.pipeline_mode<synchronous>, transform_indices = @transform_5, window_bounds = array<i64: 16, 32>}, {pipeline_mode = #tpu.pipeline_mode<synchronous>, transform_indices = @transform_6, window_bounds = array<i64: 16, 1>}, {pipeline_mode = #tpu.pipeline_mode<synchronous>, transform_indices = @transform_7, window_bounds = array<i64: 1, 16>}, {transform_indices = @transform_8, window_bounds = array<i64: 1>}, {transform_indices = @transform_9, window_bounds = array<i64: 1, 128>}]} {
    %c0 = arith.constant 0 : index
    %c0_0 = arith.constant 0 : index
    %0 = vector.load %arg1[%c0, %c0_0] : memref<128x9xf32, #tpu.memory_space<vmem>>, vector<128x9xf32>
    %c0_1 = arith.constant 0 : index
    %c0_2 = arith.constant 0 : index
    %1 = vector.load %arg2[%c0_1, %c0_2] : memref<64x9xf32, #tpu.memory_space<vmem>>, vector<64x9xf32>
    %cst = arith.constant dense<0.000000e+00> : vector<64x128xf32>
    %2 = tpu.matmul %1, %0, %cst {dimension_numbers = #tpu.dot_dimension_numbers<[1], [1], [0], [0], [0, 0, 1, 0], [], []>} : vector<64x9xf32>, vector<128x9xf32>, vector<64x128xf32> -> vector<64x128xf32>
    %c0_3 = arith.constant 0 : index
    %c0_4 = arith.constant 0 : index
    %3 = vector.load %arg3[%c0_3, %c0_4] : memref<64x1xf32, #tpu.memory_space<vmem>>, vector<64x1xf32>
    %4 = vector.broadcast %3 : vector<64x1xf32> to vector<64x128xf32>
    %5 = arith.addf %2, %4 : vector<64x128xf32>
    %cst_5 = arith.constant 0.000000e+00 : f32
    %6 = vector.broadcast %cst_5 : f32 to vector<64x128xf32>
    %7 = arith.maximumf %5, %6 : vector<64x128xf32>
    %c0_6 = arith.constant 0 : index
    %c0_7 = arith.constant 0 : index
    %8 = vector.load %arg4[%c0_6, %c0_7] : memref<32x64xf32, #tpu.memory_space<vmem>>, vector<32x64xf32>
    %cst_8 = arith.constant dense<0.000000e+00> : vector<32x128xf32>
    %9 = tpu.matmul %8, %7, %cst_8 {dimension_numbers = #tpu.dot_dimension_numbers<[1], [0], [0], [1], [0, 0, 1, 1], [], []>} : vector<32x64xf32>, vector<64x128xf32>, vector<32x128xf32> -> vector<32x128xf32>
    %c0_9 = arith.constant 0 : index
    %c0_10 = arith.constant 0 : index
    %10 = vector.load %arg5[%c0_9, %c0_10] : memref<32x1xf32, #tpu.memory_space<vmem>>, vector<32x1xf32>
    %11 = vector.broadcast %10 : vector<32x1xf32> to vector<32x128xf32>
    %12 = arith.addf %9, %11 : vector<32x128xf32>
    %cst_11 = arith.constant 0.000000e+00 : f32
    %13 = vector.broadcast %cst_11 : f32 to vector<32x128xf32>
    %14 = arith.maximumf %12, %13 : vector<32x128xf32>
    %c0_12 = arith.constant 0 : index
    %c0_13 = arith.constant 0 : index
    %15 = vector.load %arg6[%c0_12, %c0_13] : memref<16x32xf32, #tpu.memory_space<vmem>>, vector<16x32xf32>
    %cst_14 = arith.constant dense<0.000000e+00> : vector<16x128xf32>
    %16 = tpu.matmul %15, %14, %cst_14 {dimension_numbers = #tpu.dot_dimension_numbers<[1], [0], [0], [1], [0, 0, 1, 1], [], []>} : vector<16x32xf32>, vector<32x128xf32>, vector<16x128xf32> -> vector<16x128xf32>
    %c0_15 = arith.constant 0 : index
    %c0_16 = arith.constant 0 : index
    %17 = vector.load %arg7[%c0_15, %c0_16] : memref<16x1xf32, #tpu.memory_space<vmem>>, vector<16x1xf32>
    %18 = vector.broadcast %17 : vector<16x1xf32> to vector<16x128xf32>
    %19 = arith.addf %16, %18 : vector<16x128xf32>
    %cst_17 = arith.constant 0.000000e+00 : f32
    %20 = vector.broadcast %cst_17 : f32 to vector<16x128xf32>
    %21 = arith.maximumf %19, %20 : vector<16x128xf32>
    %c0_18 = arith.constant 0 : index
    %c0_19 = arith.constant 0 : index
    %22 = vector.load %arg8[%c0_18, %c0_19] : memref<1x16xf32, #tpu.memory_space<vmem>>, vector<1x16xf32>
    %cst_20 = arith.constant dense<0.000000e+00> : vector<1x128xf32>
    %23 = tpu.matmul %22, %21, %cst_20 {dimension_numbers = #tpu.dot_dimension_numbers<[1], [0], [0], [1], [0, 0, 1, 1], [], []>} : vector<1x16xf32>, vector<16x128xf32>, vector<1x128xf32> -> vector<1x128xf32>
    %c0_21 = arith.constant 0 : index
    %24 = memref.load %arg9[%c0_21] : memref<1xf32, #tpu.memory_space<smem>>
    %25 = vector.broadcast %24 : f32 to vector<1x128xf32>
    %26 = arith.addf %23, %25 : vector<1x128xf32>
    %c0_22 = arith.constant 0 : index
    %c0_23 = arith.constant 0 : index
    %27 = vector.load %arg10[%c0_22, %c0_23] : memref<1x128xf32, #tpu.memory_space<vmem>>, vector<1x128xf32>
    tpu.vector_store %arg10[%c0_22, %c0_23], %26 {strides = array<i32>} : memref<1x128xf32, #tpu.memory_space<vmem>>, vector<1x128xf32>,
    return
  }
  func.func @transform_0(%arg0: i32) -> (i32, i32) {
    %c0_i32 = arith.constant 0 : i32
    %c0_i32_0 = arith.constant 0 : i32
    return %arg0, %c0_i32 : i32, i32
  }
  func.func @transform_1(%arg0: i32) -> (i32, i32) {
    %c0_i32 = arith.constant 0 : i32
    %c0_i32_0 = arith.constant 0 : i32
    %c0_i32_1 = arith.constant 0 : i32
    return %c0_i32, %c0_i32_0 : i32, i32
  }
  func.func @transform_2(%arg0: i32) -> (i32, i32) {
    %c0_i32 = arith.constant 0 : i32
    %c0_i32_0 = arith.constant 0 : i32
    %c0_i32_1 = arith.constant 0 : i32
    return %c0_i32, %c0_i32_0 : i32, i32
  }
  func.func @transform_3(%arg0: i32) -> (i32, i32) {
    %c0_i32 = arith.constant 0 : i32
    %c0_i32_0 = arith.constant 0 : i32
    %c0_i32_1 = arith.constant 0 : i32
    return %c0_i32, %c0_i32_0 : i32, i32
  }
  func.func @transform_4(%arg0: i32) -> (i32, i32) {
    %c0_i32 = arith.constant 0 : i32
    %c0_i32_0 = arith.constant 0 : i32
    %c0_i32_1 = arith.constant 0 : i32
    return %c0_i32, %c0_i32_0 : i32, i32
  }
  func.func @transform_5(%arg0: i32) -> (i32, i32) {
    %c0_i32 = arith.constant 0 : i32
    %c0_i32_0 = arith.constant 0 : i32
    %c0_i32_1 = arith.constant 0 : i32
    return %c0_i32, %c0_i32_0 : i32, i32
  }
  func.func @transform_6(%arg0: i32) -> (i32, i32) {
    %c0_i32 = arith.constant 0 : i32
    %c0_i32_0 = arith.constant 0 : i32
    %c0_i32_1 = arith.constant 0 : i32
    return %c0_i32, %c0_i32_0 : i32, i32
  }
  func.func @transform_7(%arg0: i32) -> (i32, i32) {
    %c0_i32 = arith.constant 0 : i32
    %c0_i32_0 = arith.constant 0 : i32
    %c0_i32_1 = arith.constant 0 : i32
    return %c0_i32, %c0_i32_0 : i32, i32
  }
  func.func @transform_8(%arg0: i32) -> i32 {
    %c0_i32 = arith.constant 0 : i32
    %c0_i32_0 = arith.constant 0 : i32
    return %c0_i32 : i32
  }
  func.func @transform_9(%arg0: i32) -> (i32, i32) {
    %c0_i32 = arith.constant 0 : i32
    %c0_i32_0 = arith.constant 0 : i32
    return %c0_i32, %arg0 : i32, i32
  }
}

</mosaic_0001>

<llo_original>
// kernel: tpu_custom_call.1
$region0: #{tpu_custom_call.1}
  #allocation0 [shape = 'u32[]', space=smem, size = 0x4, offset = 0x4, fixed_abs, tag = 'smem constant byte address 0x4 - core index']
  #allocation1 [shape = 'u32[72,128]{1,0:T(1,128)}', space=vmem, size = 0x9000, scoped, tag = 'internal scratch']
  #allocation2 [shape = 'f32[1]{0:T(128)S(6)}', space=smem, size = 0x200, scoped, tag = 'scoped memory for tpu_custom_call.1']
  %s0 = inlined_call_operand.vmem [shape: f32[8,9], index: 0, kind: input, shape index: {}]
  %s1 = inlined_call_operand.vmem [shape: f32[64,9], index: 1, kind: input, shape index: {}]
  %s2 = inlined_call_operand.vmem [shape: f32[64,1], index: 2, kind: input, shape index: {}]
  %s3 = inlined_call_operand.vmem [shape: f32[32,64], index: 3, kind: input, shape index: {}]
  %s4 = inlined_call_operand.vmem [shape: f32[32,1], index: 4, kind: input, shape index: {}]
  %s5 = inlined_call_operand.vmem [shape: f32[16,32], index: 5, kind: input, shape index: {}]
  %s6 = inlined_call_operand.vmem [shape: f32[16,1], index: 6, kind: input, shape index: {}]
  %s7 = inlined_call_operand.vmem [shape: f32[1,16], index: 7, kind: input, shape index: {}]
  %s8 = inlined_call_operand.<no memory space> [shape: f32[1], index: 8, kind: input, shape index: {}]
  %s9 = inlined_call_operand.hbm [shape: f32[1,8], index: 9, kind: output, shape index: {}]
  %s10 = sld [smem:[#allocation0]]
  $region46: #{tpu_custom_call.1} parent=0
    _
  %s12 = ssub.s32 1, %s10
  %s13 = scalar_select 0, %s12, %s10
  %14 = sst [smem:[#allocation2]] %s8
  $region1: #{tpu_custom_call.1} parent=0
    #allocation3 [shape = 'u8[512]{0}', space=vmem, size = 0x400, scoped, tag = 'output window, operand 0, single buffered']
    #allocation4 [shape = 's32[1]{0}', space=sflag, size = 0x4, scoped, tag = 'scoped memory for tpu_custom_call.1']
    %15 = vsyncpa [#allocation4], 0
    // Predicated region
    $region2: #{tpu_custom_call.1} parent=1 // pred_check
      _
    $region3: #{tpu_custom_call.1} parent=1 // pred_check_branch
      %17 = sbr.rel (0) target = $region5
    $region4: #{tpu_custom_call.1} parent=1 // pred_region
      _
    $region5: #{tpu_custom_call.1} parent=1 // pred_fallthru
      _
    // Predicated region
    $region6: #{tpu_custom_call.1} parent=1 // pred_check
      _
    $region7: #{tpu_custom_call.1} parent=1 // pred_check_branch
      %19 = sbr.rel (0) target = $region9
    $region8: #{tpu_custom_call.1} parent=1 // pred_region
      _
    $region9: #{tpu_custom_call.1} parent=1 // pred_fallthru
      _
    // Predicated region
    $region10: #{tpu_custom_call.1} parent=1 // pred_check
      _
    $region11: #{tpu_custom_call.1} parent=1 // pred_check_branch
      %21 = sbr.rel (0) target = $region13
    $region12: #{tpu_custom_call.1} parent=1 // pred_region
      _
    $region13: #{tpu_custom_call.1} parent=1 // pred_fallthru
      _
    // Predicated region
    $region14: #{tpu_custom_call.1} parent=1 // pred_check
      _
    $region15: #{tpu_custom_call.1} parent=1 // pred_check_branch
      %23 = sbr.rel (0) target = $region17
    $region16: #{tpu_custom_call.1} parent=1 // pred_region
      _
    $region17: #{tpu_custom_call.1} parent=1 // pred_fallthru
      _
    // Predicated region
    $region18: #{tpu_custom_call.1} parent=1 // pred_check
      _
    $region19: #{tpu_custom_call.1} parent=1 // pred_check_branch
      %25 = sbr.rel (0) target = $region21
    $region20: #{tpu_custom_call.1} parent=1 // pred_region
      _
    $region21: #{tpu_custom_call.1} parent=1 // pred_fallthru
      _
    // Predicated region
    $region22: #{tpu_custom_call.1} parent=1 // pred_check
      _
    $region23: #{tpu_custom_call.1} parent=1 // pred_check_branch
      %27 = sbr.rel (0) target = $region25
    $region24: #{tpu_custom_call.1} parent=1 // pred_region
      _
    $region25: #{tpu_custom_call.1} parent=1 // pred_fallthru
      _
    // Predicated region
    $region26: #{tpu_custom_call.1} parent=1 // pred_check
      _
    $region27: #{tpu_custom_call.1} parent=1 // pred_check_branch
      %29 = sbr.rel (0) target = $region29
    $region28: #{tpu_custom_call.1} parent=1 // pred_region
      _
    $region29: #{tpu_custom_call.1} parent=1 // pred_fallthru
      _
    // Predicated region
    $region30: #{tpu_custom_call.1} parent=1 // pred_check
      _
    $region31: #{tpu_custom_call.1} parent=1 // pred_check_branch
      %31 = sbr.rel (0) target = $region33
    $region32: #{tpu_custom_call.1} parent=1 // pred_region
      _
    $region33: #{tpu_custom_call.1} parent=1 // pred_fallthru
      _
    // Predicated region
    $region34: #{tpu_custom_call.1} parent=1 // pred_check
      _
    $region35: #{tpu_custom_call.1} parent=1 // pred_check_branch
      %33 = sbr.rel (0) target = $region37
    $region36: #{tpu_custom_call.1} parent=1 // pred_region
      _
    $region37: #{tpu_custom_call.1} parent=1 // pred_fallthru
      _
    %v34 = vld [vmem:[%s0] sm:$0xff]
    %v35 = vld [vmem:[%s0 + $0x8] sm:$0xff]
    %v36 = vld [vmem:[%s0 + $0x10] sm:$0xff]
    %v37 = vld [vmem:[%s0 + $0x18] sm:$0xff]
    %v38 = vld [vmem:[%s0 + $0x20] sm:$0xff]
    %v39 = vld [vmem:[%s0 + $0x28] sm:$0xff]
    %v40 = vld [vmem:[%s0 + $0x30] sm:$0xff]
    %v41 = vld [vmem:[%s0 + $0x38] sm:$0xff]
    %v42 = vld [vmem:[%s0 + $0x40] sm:$0xff]
    %v43 = vld [vmem:[%s0 + $0x48] sm:$0xff]
    %v44 = vld [vmem:[%s0 + $0x50] sm:$0xff]
    %v45 = vld [vmem:[%s0 + $0x58] sm:$0xff]
    %v46 = vld [vmem:[%s0 + $0x60] sm:$0xff]
    %v47 = vld [vmem:[%s0 + $0x68] sm:$0xff]
    %v48 = vld [vmem:[%s0 + $0x70] sm:$0xff]
    %v49 = vld [vmem:[%s0 + $0x78] sm:$0xff]
    %v50 = vld [vmem:[%s1] sm:$0xff]
    %v51 = vld [vmem:[%s1 + $0x8] sm:$0xff]
    %v52 = vld [vmem:[%s1 + $0x10] sm:$0xff]
    %v53 = vld [vmem:[%s1 + $0x18] sm:$0xff]
    %v54 = vld [vmem:[%s1 + $0x20] sm:$0xff]
    %v55 = vld [vmem:[%s1 + $0x28] sm:$0xff]
    %v56 = vld [vmem:[%s1 + $0x30] sm:$0xff]
    %v57 = vld [vmem:[%s1 + $0x38] sm:$0xff]
    %v58 = vld [vmem:[%s2] sm:$0xff]
    %v59 = vld [vmem:[%s2 + $0x8] sm:$0xff]
    %v60 = vld [vmem:[%s2 + $0x10] sm:$0xff]
    %v61 = vld [vmem:[%s2 + $0x18] sm:$0xff]
    %v62 = vld [vmem:[%s2 + $0x20] sm:$0xff]
    %v63 = vld [vmem:[%s2 + $0x28] sm:$0xff]
    %v64 = vld [vmem:[%s2 + $0x30] sm:$0xff]
    %v65 = vld [vmem:[%s2 + $0x38] sm:$0xff]
    %67 = vset.pattern.permute.xlu0 0
    %68 = vperm.xlu0 %67, %v58
    %v69 = vpop.permute.xlu0 %68
    %72 = vset.pattern.permute.xlu0 0
    %73 = vperm.xlu0 %72, %v59
    %v74 = vpop.permute.xlu0 %73
    %77 = vset.pattern.permute.xlu0 0
    %78 = vperm.xlu0 %77, %v60
    %v79 = vpop.permute.xlu0 %78
    %82 = vset.pattern.permute.xlu0 0
    %83 = vperm.xlu0 %82, %v61
    %v84 = vpop.permute.xlu0 %83
    %87 = vset.pattern.permute.xlu0 0
    %88 = vperm.xlu0 %87, %v62
    %v89 = vpop.permute.xlu0 %88
    %92 = vset.pattern.permute.xlu0 0
    %93 = vperm.xlu0 %92, %v63
    %v94 = vpop.permute.xlu0 %93
    %97 = vset.pattern.permute.xlu0 0
    %98 = vperm.xlu0 %97, %v64
    %v99 = vpop.permute.xlu0 %98
    %102 = vset.pattern.permute.xlu0 0
    %103 = vperm.xlu0 %102, %v65
    %v104 = vpop.permute.xlu0 %103
    %vm106 = vcmask 72704
    %v108 = vsel %vm106, %v50, 0
    %v111 = vsel %vm106, %v51, 0
    %v114 = vsel %vm106, %v52, 0
    %v117 = vsel %vm106, %v53, 0
    %v120 = vsel %vm106, %v54, 0
    %v123 = vsel %vm106, %v55, 0
    %v126 = vsel %vm106, %v56, 0
    %v129 = vsel %vm106, %v57, 0
    %v132 = vsel %vm106, %v34, 0
    %v135 = vsel %vm106, %v35, 0
    %v138 = vsel %vm106, %v36, 0
    %v141 = vsel %vm106, %v37, 0
    %v144 = vsel %vm106, %v38, 0
    %v147 = vsel %vm106, %v39, 0
    %v150 = vsel %vm106, %v40, 0
    %v153 = vsel %vm106, %v41, 0
    %v156 = vsel %vm106, %v42, 0
    %v159 = vsel %vm106, %v43, 0
    %v162 = vsel %vm106, %v44, 0
    %v165 = vsel %vm106, %v45, 0
    %v168 = vsel %vm106, %v46, 0
    %v171 = vsel %vm106, %v47, 0
    %v174 = vsel %vm106, %v48, 0
    %v177 = vsel %vm106, %v49, 0
    %179 = vmatpush.xpose.msra.mxu0 %v177
    %180 = vmatpush.xpose.msra.mxu0 %v174
    %181 = vmatpush.xpose.msra.mxu0 %v171
    %182 = vmatpush.xpose.msra.mxu0 %v168
    %183 = vmatpush.xpose.msra.mxu0 %v165
    %184 = vmatpush.xpose.msra.mxu0 %v162
    %185 = vmatpush.xpose.msra.mxu0 %v159
    %186 = vmatpush.xpose.msra.mxu0 %v156
    %187 = vmatpush.xpose.msra.mxu0 %v153
    %188 = vmatpush.xpose.msra.mxu0 %v150
    %189 = vmatpush.xpose.msra.mxu0 %v147
    %190 = vmatpush.xpose.msra.mxu0 %v144
    %191 = vmatpush.xpose.msra.mxu0 %v141
    %192 = vmatpush.xpose.msra.mxu0 %v138
    %193 = vmatpush.xpose.msra.mxu0 %v135
    %194 = vmatpush.xpose.msra.mxu0 %v132
    %195 = vmatmul.f32.gmra.mxu0 %v108
    %v196 = vpop.f32.mrf.mxu0
    %v197 = vadd.f32 %v69, %v196
    %198 = vmatmul.f32.gmra.mxu0 %v111
    %v199 = vpop.f32.mrf.mxu0
    %v200 = vadd.f32 %v74, %v199
    %201 = vmatmul.f32.gmra.mxu0 %v114
    %v202 = vpop.f32.mrf.mxu0
    %v203 = vadd.f32 %v79, %v202
    %204 = vmatmul.f32.gmra.mxu0 %v117
    %v205 = vpop.f32.mrf.mxu0
    %v206 = vadd.f32 %v84, %v205
    %207 = vmatmul.f32.gmra.mxu0 %v120
    %v208 = vpop.f32.mrf.mxu0
    %v209 = vadd.f32 %v89, %v208
    %210 = vmatmul.f32.gmra.mxu0 %v123
    %v211 = vpop.f32.mrf.mxu0
    %v212 = vadd.f32 %v94, %v211
    %213 = vmatmul.f32.gmra.mxu0 %v126
    %v214 = vpop.f32.mrf.mxu0
    %v215 = vadd.f32 %v99, %v214
    %216 = vmatmul.f32.gmra.mxu0 %v129
    %v217 = vpop.f32.mrf.mxu0
    %v218 = vadd.f32 %v104, %v217
    %219 = vdwg.mxu0
    %v220 = vmax.f32 %v197, 0.0
    %v221 = vmax.f32 %v200, 0.0
    %v222 = vmax.f32 %v203, 0.0
    %v223 = vmax.f32 %v206, 0.0
    %v224 = vmax.f32 %v209, 0.0
    %v225 = vmax.f32 %v212, 0.0
    %v226 = vmax.f32 %v215, 0.0
    %v227 = vmax.f32 %v218, 0.0
    %v228 = vld [vmem:[%s3] sm:$0xff]
    %v229 = vld [vmem:[%s3 + $0x8] sm:$0xff]
    %v230 = vld [vmem:[%s3 + $0x10] sm:$0xff]
    %v231 = vld [vmem:[%s3 + $0x18] sm:$0xff]
    %v232 = vld [vmem:[%s4] sm:$0xff]
    %v233 = vld [vmem:[%s4 + $0x8] sm:$0xff]
    %v234 = vld [vmem:[%s4 + $0x10] sm:$0xff]
    %v235 = vld [vmem:[%s4 + $0x18] sm:$0xff]
    %237 = vset.pattern.permute.xlu0 0
    %238 = vperm.xlu0 %237, %v232
    %v239 = vpop.permute.xlu0 %238
    %242 = vset.pattern.permute.xlu0 0
    %243 = vperm.xlu0 %242, %v233
    %v244 = vpop.permute.xlu0 %243
    %247 = vset.pattern.permute.xlu0 0
    %248 = vperm.xlu0 %247, %v234
    %v249 = vpop.permute.xlu0 %248
    %252 = vset.pattern.permute.xlu0 0
    %253 = vperm.xlu0 %252, %v235
    %v254 = vpop.permute.xlu0 %253
    %vm256 = vcmask 523264
    %v258 = vsel %vm256, %v228, 0
    %v261 = vsel %vm256, %v229, 0
    %v264 = vsel %vm256, %v230, 0
    %v267 = vsel %vm256, %v231, 0
    %269 = vmatpush.msra.mxu0 0.0
    %270 = vmatpush.msra.mxu0 0.0
    %271 = vmatpush.msra.mxu0 0.0
    %272 = vmatpush.msra.mxu0 0.0
    %273 = vmatpush.msra.mxu0 0.0
    %274 = vmatpush.msra.mxu0 0.0
    %275 = vmatpush.msra.mxu0 0.0
    %276 = vmatpush.msra.mxu0 0.0
    %277 = vmatpush.msra.mxu0 %v227
    %278 = vmatpush.msra.mxu0 %v226
    %279 = vmatpush.msra.mxu0 %v225
    %280 = vmatpush.msra.mxu0 %v224
    %281 = vmatpush.msra.mxu0 %v223
    %282 = vmatpush.msra.mxu0 %v222
    %283 = vmatpush.msra.mxu0 %v221
    %284 = vmatpush.msra.mxu0 %v220
    %285 = vmatmul.f32.gmra.mxu0 %v258
    %v286 = vpop.f32.mrf.mxu0
    %v287 = vadd.f32 %v239, %v286
    %288 = vmatmul.f32.gmra.mxu0 %v261
    %v289 = vpop.f32.mrf.mxu0
    %v290 = vadd.f32 %v244, %v289
    %291 = vmatmul.f32.gmra.mxu0 %v264
    %v292 = vpop.f32.mrf.mxu0
    %v293 = vadd.f32 %v249, %v292
    %294 = vmatmul.f32.gmra.mxu0 %v267
    %v295 = vpop.f32.mrf.mxu0
    %v296 = vadd.f32 %v254, %v295
    %297 = vdwg.mxu0
    %v298 = vmax.f32 %v287, 0.0
    %v299 = vmax.f32 %v290, 0.0
    %v300 = vmax.f32 %v293, 0.0
    %v301 = vmax.f32 %v296, 0.0
    %v302 = vld [vmem:[%s5] sm:$0xff]
    %v303 = vld [vmem:[%s5 + $0x8] sm:$0xff]
    %v304 = vld [vmem:[%s6] sm:$0xff]
    %v305 = vld [vmem:[%s6 + $0x8] sm:$0xff]
    %307 = vset.pattern.permute.xlu0 0
    %308 = vperm.xlu0 %307, %v304
    %v309 = vpop.permute.xlu0 %308
    %312 = vset.pattern.permute.xlu0 0
    %313 = vperm.xlu0 %312, %v305
    %v314 = vpop.permute.xlu0 %313
    %vm316 = vcmask 261120
    %v318 = vsel %vm316, %v302, 0
    %v321 = vsel %vm316, %v303, 0
    %323 = vmatpush.msra.mxu0 0.0
    %324 = vmatpush.msra.mxu0 0.0
    %325 = vmatpush.msra.mxu0 0.0
    %326 = vmatpush.msra.mxu0 0.0
    %327 = vmatpush.msra.mxu0 0.0
    %328 = vmatpush.msra.mxu0 0.0
    %329 = vmatpush.msra.mxu0 0.0
    %330 = vmatpush.msra.mxu0 0.0
    %331 = vmatpush.msra.mxu0 0.0
    %332 = vmatpush.msra.mxu0 0.0
    %333 = vmatpush.msra.mxu0 0.0
    %334 = vmatpush.msra.mxu0 0.0
    %335 = vmatpush.msra.mxu0 %v301
    %336 = vmatpush.msra.mxu0 %v300
    %337 = vmatpush.msra.mxu0 %v299
    %338 = vmatpush.msra.mxu0 %v298
    %339 = vmatmul.f32.gmra.mxu0 %v318
    %v340 = vpop.f32.mrf.mxu0
    %v341 = vadd.f32 %v309, %v340
    %342 = vmatmul.f32.gmra.mxu0 %v321
    %v343 = vpop.f32.mrf.mxu0
    %v344 = vadd.f32 %v314, %v343
    %345 = vdwg.mxu0
    %v346 = vmax.f32 %v341, 0.0
    %v347 = vmax.f32 %v344, 0.0
    %v348 = vld [vmem:[%s7] sm:$0x1]
    %s349 = sld [smem:[#allocation2]]
    %v350 = vstv %s349
    %vm351 = vcmask 130048
    %v353 = vsel %vm351, %v348, 0
    %355 = vmatpush.msra.mxu0 0.0
    %356 = vmatpush.msra.mxu0 0.0
    %357 = vmatpush.msra.mxu0 0.0
    %358 = vmatpush.msra.mxu0 0.0
    %359 = vmatpush.msra.mxu0 0.0
    %360 = vmatpush.msra.mxu0 0.0
    %361 = vmatpush.msra.mxu0 0.0
    %362 = vmatpush.msra.mxu0 0.0
    %363 = vmatpush.msra.mxu0 0.0
    %364 = vmatpush.msra.mxu0 0.0
    %365 = vmatpush.msra.mxu0 0.0
    %366 = vmatpush.msra.mxu0 0.0
    %367 = vmatpush.msra.mxu0 0.0
    %368 = vmatpush.msra.mxu0 0.0
    %369 = vmatpush.msra.mxu0 %v347
    %370 = vmatpush.msra.mxu0 %v346
    %371 = vmatmul.f32.gmra.mxu0 %v353
    %v372 = vpop.f32.mrf.mxu0
    %v373 = vadd.f32 %v350, %v372
    %374 = vdwg.mxu0
    %375 = vst [vmem:[#allocation3] sm:$0x1] %v373
    // Predicated region
    $region38: #{tpu_custom_call.1} parent=1 // pred_check
      _
    $region39: #{tpu_custom_call.1} parent=1 // pred_check_branch
      %377 = sbr.rel (0) target = $region41
    $region40: #{tpu_custom_call.1} parent=1 // pred_region
      %379 = vsyncadd [#allocation4], 0
      %s381 = sshll.u32 [#allocation3], 4
      %s382 = int_to_ptr.vmem [resolvable:$true] %s381
      %s383 = sshll.u32 %s9, 4
      %s384 = int_to_ptr.hbm [resolvable:$true] %s383
      %386 = dma.vmem_to_hbm [thread:$0]  %s382, 16, %s384, [#allocation4]
    $region41: #{tpu_custom_call.1} parent=1 // pred_fallthru
      _
    // Predicated region
    $region42: #{tpu_custom_call.1} parent=1 // pred_check
      _
    $region43: #{tpu_custom_call.1} parent=1 // pred_check_branch
      %388 = sbr.rel (0) target = $region45
    $region44: #{tpu_custom_call.1} parent=1 // pred_region
      %390 = dma.done [#allocation4], 16
    $region45: #{tpu_custom_call.1} parent=1 // pred_fallthru
      _
    %391 = vsyncpa [#allocation4], 1

</llo_original>
